<compile_context>
chip_gen: v7x
topology: tpu7x:2x2x1
jax: 0.10.0
libtpu: 0.0.40
codegen_flags: <defaults>
</compile_context>

<pallas_src>
import functools

import jax
import jax.numpy as jnp
from jax import lax
from jax.experimental import pallas as pl
from jax.experimental.pallas import tpu as pltpu


def _fused_single_tile_kernel(x_ref, w_ref, b_ref, out_ref):
    """Single-K-tile path: one fused MXU contraction, no accumulator scratch.

    x_ref  : (2, TB, K)    re/im activations, K = N*S on the lane axis
    w_ref  : (2, K, C)     per-part (re/im) weights, node-tiled
    b_ref  : (1, C) f32    bias
    out_ref: (TB, C)       logits
    """
    out_ref[...] = (
        jnp.dot(x_ref[0], w_ref[0], preferred_element_type=jnp.float32)
        + jnp.dot(x_ref[1], w_ref[1], preferred_element_type=jnp.float32)
        + b_ref[...]
    ).astype(out_ref.dtype)


def _fused_tiled_kernel(x_ref, w_ref, b_ref, out_ref, acc_ref, *, K, tk, ragged):
    """(batch-tile, K-tile) grid step with an f32 accumulator resident over K.

    x_ref  : (2, TB, TK)   re/im activations
    w_ref  : (2, TK, C)    per-part weights (zero-padded to the grid's Kp)
    b_ref  : (1, C) f32    bias
    out_ref: (TB, C)       logits
    acc_ref: (TB, C) f32   accumulator, resident across the K grid axis
    """
    k = pl.program_id(1)

    @pl.when(k == 0)
    def _():
        acc_ref[...] = jnp.zeros_like(acc_ref)

    x = x_ref[...]                                        # (2, TB, TK)
    if ragged:
        # The last K block straddles the array edge; its out-of-bounds portion
        # is garbage in VMEM.  Mask it explicitly (garbage * zero-weight could
        # still be NaN).  For non-last steps `valid >= tk`, so this is a no-op
        # select on the VPU.
        lane = lax.broadcasted_iota(jnp.int32, (1, 1, tk), 2)
        valid = K - k * tk
        x = jnp.where(lane < valid, x, jnp.zeros((), x.dtype))

    # Single accumulator read-modify-write per step.
    acc_ref[...] += (
        jnp.dot(x[0], w_ref[0], preferred_element_type=jnp.float32)
        + jnp.dot(x[1], w_ref[1], preferred_element_type=jnp.float32)
    )

    @pl.when(k == pl.num_programs(1) - 1)
    def _():
        out_ref[...] = (acc_ref[...] + b_ref[...]).astype(out_ref.dtype)


def output_linear(scalars, weight, bias=None, *, max_tk=None):
    """JAX/Pallas implementation of OutputLinear.forward.

    scalars: (2, B, N, num_scalars, 1)   f32 or bf16 (bf16 halves HBM traffic)
    weight : (num_classes, 2 * num_scalars)
    bias   : (num_classes,) or None
    max_tk : optional cap on the K tile (testing / tuning)
    Returns: (B, num_classes) in scalars' compute dtype
    """
    two, B, N, S, last = scalars.shape
    assert two == 2 and last == 1, scalars.shape
    if S == 0:  # num_scalars == 0 -> pass-through, as in the PyTorch module
        return scalars

    C = weight.shape[0]
    K = N * S

    # Compute dtype: keep bf16/f32 as given (no wrapper cast of the big tensor);
    # anything else (e.g. f64 with x64 enabled) drops to f32.
    if scalars.dtype in (jnp.bfloat16, jnp.float32):
        compute_dtype = scalars.dtype
    else:
        compute_dtype = jnp.float32

    # Free reshape: (2, B, N, S, 1) -> (2, B, N*S); trailing axes are contiguous.
    x = scalars.reshape(2, B, K)
    if x.dtype != compute_dtype:
        x = x.astype(compute_dtype)
    out_dtype = compute_dtype

    # Split the interleaved (re, im) columns of the Linear weight and tile the
    # tiny (S, C) blocks N times so the node-sum folds into the MXU contraction.
    # (Weight cast to the activation dtype for a native MXU pass; it is tiny.)
    w_re = jnp.transpose(weight[:, 0::2]).astype(compute_dtype)  # (S, C)
    w_im = jnp.transpose(weight[:, 1::2]).astype(compute_dtype)  # (S, C)
    wbig = jnp.stack([jnp.tile(w_re, (N, 1)), jnp.tile(w_im, (N, 1))])  # (2, K, C)

    # Bias / accumulation stay f32 for precision regardless of activation dtype.
    b = bias if bias is not None else jnp.zeros((C,), jnp.float32)
    b = b.reshape(1, C).astype(jnp.float32)

    # ---- batch tiling (parallel grid axis) ---------------------------------
    # Prefer >= 2 batch tiles so both v7x TensorCores get work; fall back to a
    # single full-B tile when B is small or not sublane-aligned.
    sub = 16 if compute_dtype == jnp.bfloat16 else 8
    tb = B
    if B % sub == 0:
        for cand in (512, 256, 128, 64, 32, 16, 8):
            if cand % sub == 0 and B % cand == 0 and B // cand >= 2:
                tb = cand
                break

    # ---- generation-aware VMEM budget --------------------------------------
    try:
        vmem_cap = int(pltpu.get_tpu_info().vmem_capacity_bytes)
    except Exception:
        vmem_cap = 64 * 1024 * 1024          # conservative (v7x-sized)
    if vmem_cap >= 128 * 1024 * 1024:        # v5e / v6e: 128 MiB physical
        budget_bytes = 24 * 1024 * 1024      # per-step x+w tile (double-buffered by Pallas)
        vmem_limit = 96 * 1024 * 1024
    else:                                    # v7x: 64 MiB physical
        budget_bytes = 12 * 1024 * 1024
        vmem_limit = 48 * 1024 * 1024

    LANE = 128
    x_isz = jnp.dtype(compute_dtype).itemsize
    bytes_per_k = x_isz * (2 * tb + 2 * C)                 # x + w bytes per K element
    tk_cap = max(LANE, (budget_bytes // bytes_per_k) // LANE * LANE)
    if max_tk is not None:
        tk_cap = max(LANE, (min(tk_cap, max_tk) // LANE) * LANE)

    if K <= tk_cap:
        # ---- single-K-tile fast path (common for moderate N*S) -------------
        return pl.pallas_call(
            _fused_single_tile_kernel,
            out_shape=jax.ShapeDtypeStruct((B, C), out_dtype),
            grid_spec=pltpu.PrefetchScalarGridSpec(
                num_scalar_prefetch=0,
                grid=(B // tb,),
                in_specs=[
                    pl.BlockSpec((2, tb, K), lambda i: (0, i, 0)),
                    pl.BlockSpec((2, K, C), lambda i: (0, 0, 0)),
                    pl.BlockSpec((1, C), lambda i: (0, 0)),
                ],
                out_specs=pl.BlockSpec((tb, C), lambda i: (i, 0)),
            ),
            compiler_params=pltpu.CompilerParams(
                dimension_semantics=("parallel",),
                vmem_limit_bytes=vmem_limit,
            ),
            cost_estimate=pl.CostEstimate(
                flops=4 * B * K * C,
                transcendentals=0,
                bytes_accessed=(x_isz * 2 * B * K              # activations
                                + (B // tb) * x_isz * 2 * K * C  # weight per batch tile
                                + x_isz * B * C + 4 * C),        # output + bias
            ),
        )(x, wbig, b)

    # ---- tiled-K path: NO pad of x; ragged tail masked in-kernel -----------
    tk = tk_cap
    Kt = pl.cdiv(K, tk)
    Kp = Kt * tk
    ragged = Kp != K
    if ragged:
        # Only the tiny weight is padded (zeros contribute zero).
        wbig = jnp.pad(wbig, ((0, 0), (0, Kp - K), (0, 0)))

    kernel = functools.partial(_fused_tiled_kernel, K=K, tk=tk, ragged=ragged)
    return pl.pallas_call(
        kernel,
        out_shape=jax.ShapeDtypeStruct((B, C), out_dtype),
        grid_spec=pltpu.PrefetchScalarGridSpec(
            num_scalar_prefetch=0,
            grid=(B // tb, Kt),
            in_specs=[
                pl.BlockSpec((2, tb, tk), lambda i, k: (0, i, k)),
                pl.BlockSpec((2, tk, C), lambda i, k: (0, k, 0)),
                pl.BlockSpec((1, C), lambda i, k: (0, 0)),
            ],
            out_specs=pl.BlockSpec((tb, C), lambda i, k: (i, 0)),
            scratch_shapes=[pltpu.VMEM((tb, C), jnp.float32)],
        ),
        compiler_params=pltpu.CompilerParams(
            dimension_semantics=("parallel", "arbitrary"),
            vmem_limit_bytes=vmem_limit,
        ),
        cost_estimate=pl.CostEstimate(
            flops=4 * B * Kp * C,
            transcendentals=0,
            bytes_accessed=(x_isz * 2 * B * K                  # activations (read once)
                            + (B // tb) * x_isz * 2 * Kp * C   # weight re-read per batch tile
                            + x_isz * B * C + 4 * C),          # output + bias
        ),
    )(x, wbig, b)


def _reference(scalars, weight, bias=None):
    """Pure-JAX replica of the PyTorch forward (correctness check)."""
    two, B, N, S, _ = scalars.shape
    x = jnp.sum(scalars, axis=2)                        # (2, B, S, 1)
    x = jnp.transpose(x, (1, 2, 3, 0)).reshape(B, 2 * S)
    out = x @ weight.T
    if bias is not None:
        out = out + bias
    return out


if __name__ == "__main__":
    key = jax.random.PRNGKey(0)
    k1, k2, k3 = jax.random.split(key, 3)

    # ---- test 1: f32, single-K-tile fast path (small jet-tagging shapes) ----
    B, N, S, C = 4, 16, 7, 5  # batch, nodes, num_scalars, num_classes
    scalars = jax.random.normal(k1, (2, B, N, S, 1), dtype=jnp.float32)
    weight = jax.random.normal(k2, (C, 2 * S), dtype=jnp.float32) * 0.1
    bias = jax.random.normal(k3, (C,), dtype=jnp.float32) * 0.1

    out = jax.block_until_ready(output_linear(scalars, weight, bias))
    assert out.shape == (B, C), out.shape
    ref = _reference(scalars, weight, bias)
    assert jnp.allclose(out, ref, atol=1e-4, rtol=1e-4), jnp.max(jnp.abs(out - ref))

    # ---- test 2: bf16 activations (halved HBM traffic), f32 accumulation ----
    scalars_bf = scalars.astype(jnp.bfloat16)
    out_bf = jax.block_until_ready(output_linear(scalars_bf, weight, bias))
    ref_bf = _reference(
        scalars_bf.astype(jnp.float32),
        weight.astype(jnp.bfloat16).astype(jnp.float32),
        bias,
    )
    assert jnp.allclose(out_bf.astype(jnp.float32), ref_bf, atol=2e-2, rtol=2e-2), (
        jnp.max(jnp.abs(out_bf.astype(jnp.float32) - ref_bf)))

    # ---- test 3: tiled-K path with a ragged last tile (forced small tk) -----
    B2, N2, S2 = 8, 20, 7  # K = 140 -> two 128-wide K tiles, last one ragged
    k4 = jax.random.PRNGKey(1)
    scalars2 = jax.random.normal(k4, (2, B2, N2, S2, 1), dtype=jnp.float32)
    out2 = jax.block_until_ready(output_linear(scalars2, weight, bias, max_tk=128))
    ref2 = _reference(scalars2, weight, bias)
    assert out2.shape == (B2, C), out2.shape
    assert jnp.allclose(out2, ref2, atol=1e-4, rtol=1e-4), jnp.max(jnp.abs(out2 - ref2))

    print("KERNEL_OK")
</pallas_src>

<mosaic_0001>
module attributes {stable_mosaic.version = 11 : i64} {
  func.func @_fused_single_tile_kernel(%arg0: i32, %arg1: memref<2x4x112xf32, #tpu.memory_space<vmem>>, %arg2: memref<2x112x5xf32, #tpu.memory_space<vmem>>, %arg3: memref<1x5xf32, #tpu.memory_space<vmem>>, %arg4: memref<4x5xf32, #tpu.memory_space<vmem>>) attributes {dimension_semantics = [#tpu.dimension_semantics<parallel>], iteration_bounds = array<i64: 1>, scalar_prefetch = 0 : i64, scratch_operands = 0 : i64, tpu.core_type = #tpu.core_type<tc>, window_params = [{transform_indices = @transform_0, window_bounds = array<i64: 2, 4, 112>}, {pipeline_mode = #tpu.pipeline_mode<synchronous>, transform_indices = @transform_1, window_bounds = array<i64: 2, 112, 5>}, {pipeline_mode = #tpu.pipeline_mode<synchronous>, transform_indices = @transform_2, window_bounds = array<i64: 1, 5>}, {transform_indices = @transform_3, window_bounds = array<i64: 4, 5>}]} {
    %c0 = arith.constant 0 : index
    %c0_0 = arith.constant 0 : index
    %c0_1 = arith.constant 0 : index
    %0 = vector.load %arg1[%c0, %c0_0, %c0_1] : memref<2x4x112xf32, #tpu.memory_space<vmem>>, vector<1x4x112xf32>
    %1 = vector.shape_cast %0 : vector<1x4x112xf32> to vector<4x112xf32>
    %c0_2 = arith.constant 0 : index
    %c0_3 = arith.constant 0 : index
    %c0_4 = arith.constant 0 : index
    %2 = vector.load %arg2[%c0_2, %c0_3, %c0_4] : memref<2x112x5xf32, #tpu.memory_space<vmem>>, vector<1x112x5xf32>
    %3 = vector.shape_cast %2 : vector<1x112x5xf32> to vector<112x5xf32>
    %cst = arith.constant dense<0.000000e+00> : vector<4x5xf32>
    %4 = tpu.matmul %1, %3, %cst {dimension_numbers = #tpu.dot_dimension_numbers<[1], [0], [0], [1], [0, 0, 1, 1], [], []>} : vector<4x112xf32>, vector<112x5xf32>, vector<4x5xf32> -> vector<4x5xf32>
    %c1 = arith.constant 1 : index
    %c0_5 = arith.constant 0 : index
    %c0_6 = arith.constant 0 : index
    %5 = vector.load %arg1[%c1, %c0_5, %c0_6] : memref<2x4x112xf32, #tpu.memory_space<vmem>>, vector<1x4x112xf32>
    %6 = vector.shape_cast %5 : vector<1x4x112xf32> to vector<4x112xf32>
    %c1_7 = arith.constant 1 : index
    %c0_8 = arith.constant 0 : index
    %c0_9 = arith.constant 0 : index
    %7 = vector.load %arg2[%c1_7, %c0_8, %c0_9] : memref<2x112x5xf32, #tpu.memory_space<vmem>>, vector<1x112x5xf32>
    %8 = vector.shape_cast %7 : vector<1x112x5xf32> to vector<112x5xf32>
    %cst_10 = arith.constant dense<0.000000e+00> : vector<4x5xf32>
    %9 = tpu.matmul %6, %8, %cst_10 {dimension_numbers = #tpu.dot_dimension_numbers<[1], [0], [0], [1], [0, 0, 1, 1], [], []>} : vector<4x112xf32>, vector<112x5xf32>, vector<4x5xf32> -> vector<4x5xf32>
    %10 = arith.addf %4, %9 : vector<4x5xf32>
    %c0_11 = arith.constant 0 : index
    %c0_12 = arith.constant 0 : index
    %11 = vector.load %arg3[%c0_11, %c0_12] : memref<1x5xf32, #tpu.memory_space<vmem>>, vector<1x5xf32>
    %12 = vector.broadcast %11 : vector<1x5xf32> to vector<4x5xf32>
    %13 = arith.addf %10, %12 : vector<4x5xf32>
    %c0_13 = arith.constant 0 : index
    %c0_14 = arith.constant 0 : index
    %14 = vector.load %arg4[%c0_13, %c0_14] : memref<4x5xf32, #tpu.memory_space<vmem>>, vector<4x5xf32>
    tpu.vector_store %arg4[%c0_13, %c0_14], %13 {strides = array<i32>} : memref<4x5xf32, #tpu.memory_space<vmem>>, vector<4x5xf32>,
    return
  }
  func.func @transform_0(%arg0: i32) -> (i32, i32, i32) {
    %c0_i32 = arith.constant 0 : i32
    %c0_i32_0 = arith.constant 0 : i32
    %c0_i32_1 = arith.constant 0 : i32
    return %c0_i32, %arg0, %c0_i32_0 : i32, i32, i32
  }
  func.func @transform_1(%arg0: i32) -> (i32, i32, i32) {
    %c0_i32 = arith.constant 0 : i32
    %c0_i32_0 = arith.constant 0 : i32
    %c0_i32_1 = arith.constant 0 : i32
    %c0_i32_2 = arith.constant 0 : i32
    return %c0_i32, %c0_i32_0, %c0_i32_1 : i32, i32, i32
  }
  func.func @transform_2(%arg0: i32) -> (i32, i32) {
    %c0_i32 = arith.constant 0 : i32
    %c0_i32_0 = arith.constant 0 : i32
    %c0_i32_1 = arith.constant 0 : i32
    return %c0_i32, %c0_i32_0 : i32, i32
  }
  func.func @transform_3(%arg0: i32) -> (i32, i32) {
    %c0_i32 = arith.constant 0 : i32
    %c0_i32_0 = arith.constant 0 : i32
    return %arg0, %c0_i32 : i32, i32
  }
}

</mosaic_0001>

<llo_original>
// kernel: tpu_custom_call.1
$region0: #{tpu_custom_call.1}
  #allocation0 [shape = 'u32[]', space=smem, size = 0x4, offset = 0x4, fixed_abs, tag = 'smem constant byte address 0x4 - core index']
  #allocation1 [shape = 'u32[144,128]{1,0:T(1,128)}', space=vmem, size = 0x12000, scoped, tag = 'internal scratch']
  %s0 = inlined_call_operand.vmem [shape: f32[2,4,112], index: 0, kind: input, shape index: {}]
  %s1 = inlined_call_operand.vmem [shape: f32[2,112,5], index: 1, kind: input, shape index: {}]
  %s2 = inlined_call_operand.vmem [shape: f32[1,5], index: 2, kind: input, shape index: {}]
  %s3 = inlined_call_operand.hbm [shape: f32[4,5], index: 3, kind: output, shape index: {}]
  %s4 = sld [smem:[#allocation0]]
  $region22: #{tpu_custom_call.1} parent=0
    _
  %s6 = ssub.s32 1, %s4
  %s7 = scalar_select 0, %s6, %s4
  $region1: #{tpu_custom_call.1} parent=0
    #allocation2 [shape = 'u8[2048]{0}', space=vmem, size = 0x800, scoped, tag = 'output window, operand 0, single buffered']
    #allocation3 [shape = 's32[1]{0}', space=sflag, size = 0x4, scoped, tag = 'scoped memory for tpu_custom_call.1']
    %8 = vsyncpa [#allocation3], 0
    // Predicated region
    $region2: #{tpu_custom_call.1} parent=1 // pred_check
      _
    $region3: #{tpu_custom_call.1} parent=1 // pred_check_branch
      %10 = sbr.rel (0) target = $region5
    $region4: #{tpu_custom_call.1} parent=1 // pred_region
      _
    $region5: #{tpu_custom_call.1} parent=1 // pred_fallthru
      _
    // Predicated region
    $region6: #{tpu_custom_call.1} parent=1 // pred_check
      _
    $region7: #{tpu_custom_call.1} parent=1 // pred_check_branch
      %12 = sbr.rel (0) target = $region9
    $region8: #{tpu_custom_call.1} parent=1 // pred_region
      _
    $region9: #{tpu_custom_call.1} parent=1 // pred_fallthru
      _
    // Predicated region
    $region10: #{tpu_custom_call.1} parent=1 // pred_check
      _
    $region11: #{tpu_custom_call.1} parent=1 // pred_check_branch
      %14 = sbr.rel (0) target = $region13
    $region12: #{tpu_custom_call.1} parent=1 // pred_region
      _
    $region13: #{tpu_custom_call.1} parent=1 // pred_fallthru
      _
    %v15 = vld [vmem:[%s0] sm:$0xf]
    %v16 = vld [vmem:[%s1] sm:$0xff]
    %v17 = vld [vmem:[%s1 + $0x8] sm:$0xff]
    %v18 = vld [vmem:[%s1 + $0x10] sm:$0xff]
    %v19 = vld [vmem:[%s1 + $0x18] sm:$0xff]
    %v20 = vld [vmem:[%s1 + $0x20] sm:$0xff]
    %v21 = vld [vmem:[%s1 + $0x28] sm:$0xff]
    %v22 = vld [vmem:[%s1 + $0x30] sm:$0xff]
    %v23 = vld [vmem:[%s1 + $0x38] sm:$0xff]
    %v24 = vld [vmem:[%s1 + $0x40] sm:$0xff]
    %v25 = vld [vmem:[%s1 + $0x48] sm:$0xff]
    %v26 = vld [vmem:[%s1 + $0x50] sm:$0xff]
    %v27 = vld [vmem:[%s1 + $0x58] sm:$0xff]
    %v28 = vld [vmem:[%s1 + $0x60] sm:$0xff]
    %v29 = vld [vmem:[%s1 + $0x68] sm:$0xff]
    %s30 = scalar_lea.vmem %s0, 4
    %v31 = vld [vmem:[%s30] sm:$0xf]
    %s32 = scalar_lea.vmem %s1, 112
    %v33 = vld [vmem:[%s32] sm:$0xff]
    %v34 = vld [vmem:[%s32 + $0x8] sm:$0xff]
    %v35 = vld [vmem:[%s32 + $0x10] sm:$0xff]
    %v36 = vld [vmem:[%s32 + $0x18] sm:$0xff]
    %v37 = vld [vmem:[%s32 + $0x20] sm:$0xff]
    %v38 = vld [vmem:[%s32 + $0x28] sm:$0xff]
    %v39 = vld [vmem:[%s32 + $0x30] sm:$0xff]
    %v40 = vld [vmem:[%s32 + $0x38] sm:$0xff]
    %v41 = vld [vmem:[%s32 + $0x40] sm:$0xff]
    %v42 = vld [vmem:[%s32 + $0x48] sm:$0xff]
    %v43 = vld [vmem:[%s32 + $0x50] sm:$0xff]
    %v44 = vld [vmem:[%s32 + $0x58] sm:$0xff]
    %v45 = vld [vmem:[%s32 + $0x60] sm:$0xff]
    %v46 = vld [vmem:[%s32 + $0x68] sm:$0xff]
    %vm47 = vcmask 916480
    %v49 = vsel %vm47, %v31, 0
    %51 = vmatprep.subr.mxu0 0.0
    %52 = vmatpush1.msra.mxu0 %v33
    %53 = vmatprep.subr.mxu0 0.0
    %54 = vmatpush1.msra.mxu0 %v34
    %55 = vmatprep.subr.mxu0 0.0
    %56 = vmatpush1.msra.mxu0 %v35
    %57 = vmatprep.subr.mxu0 0.0
    %58 = vmatpush1.msra.mxu0 %v36
    %59 = vmatprep.subr.mxu0 0.0
    %60 = vmatpush1.msra.mxu0 %v37
    %61 = vmatprep.subr.mxu0 0.0
    %62 = vmatpush1.msra.mxu0 %v38
    %63 = vmatprep.subr.mxu0 0.0
    %64 = vmatpush1.msra.mxu0 %v39
    %65 = vmatprep.subr.mxu0 0.0
    %66 = vmatpush1.msra.mxu0 %v40
    %67 = vmatprep.subr.mxu0 0.0
    %68 = vmatpush1.msra.mxu0 %v41
    %69 = vmatprep.subr.mxu0 0.0
    %70 = vmatpush1.msra.mxu0 %v42
    %71 = vmatprep.subr.mxu0 0.0
    %72 = vmatpush1.msra.mxu0 %v43
    %73 = vmatprep.subr.mxu0 0.0
    %74 = vmatpush1.msra.mxu0 %v44
    %75 = vmatprep.subr.mxu0 0.0
    %76 = vmatpush1.msra.mxu0 %v45
    %77 = vmatprep.subr.mxu0 0.0
    %78 = vmatpush1.msra.mxu0 %v46
    %79 = vmatprep.subr.mxu0 0.0
    %80 = vmatpush1.msra.mxu0 0.0
    %81 = vmatprep.subr.mxu0 0.0
    %82 = vmatpush1.msra.mxu0 0.0
    %83 = vmatprep.subr.mxu0 0.0
    %84 = vmatpush1.msra.mxu0 0.0
    %85 = vmatprep.subr.mxu0 0.0
    %86 = vmatpush1.msra.mxu0 0.0
    %87 = vmatprep.subr.mxu0 0.0
    %88 = vmatpush1.msra.mxu0 0.0
    %89 = vmatprep.subr.mxu0 0.0
    %90 = vmatpush1.msra.mxu0 0.0
    %91 = vmatprep.subr.mxu0 0.0
    %92 = vmatpush1.msra.mxu0 0.0
    %93 = vmatprep.subr.mxu0 0.0
    %94 = vmatpush1.msra.mxu0 0.0
    %95 = vmatprep.subr.mxu0 0.0
    %96 = vmatpush1.msra.mxu0 0.0
    %97 = vmatprep.subr.mxu0 0.0
    %98 = vmatpush1.msra.mxu0 0.0
    %99 = vmatprep.subr.mxu0 0.0
    %100 = vmatpush1.msra.mxu0 0.0
    %101 = vmatprep.subr.mxu0 0.0
    %102 = vmatpush1.msra.mxu0 0.0
    %103 = vmatprep.subr.mxu0 0.0
    %104 = vmatpush1.msra.mxu0 0.0
    %105 = vmatprep.subr.mxu0 0.0
    %106 = vmatpush1.msra.mxu0 0.0
    %107 = vmatprep.subr.mxu0 0.0
    %108 = vmatpush1.msra.mxu0 0.0
    %109 = vmatprep.subr.mxu0 0.0
    %110 = vmatpush1.msra.mxu0 0.0
    %111 = vmatprep.subr.mxu0 0.0
    %112 = vmatpush1.msra.mxu0 0.0
    %113 = vmatprep.subr.mxu0 0.0
    %114 = vmatpush1.msra.mxu0 0.0
    %115 = vmatprep.mubr.f32.mxu0 0.0
    %116 = vmatmul.mubr.f32.gmra.mrb[0].mxu0 %v49
    %v117 = vpop.f32.mrb[0].mxu0
    %v118 = vadd.f32 0.0, %v117
    %v119 = vpop.f32.mrb[0].mxu0
    %120 = vdwg.mxu0
    %v122 = vsel %vm47, %v15, 0
    %124 = vmatprep.subr.mxu0 0.0
    %125 = vmatpush1.msra.mxu0 %v16
    %126 = vmatprep.subr.mxu0 0.0
    %127 = vmatpush1.msra.mxu0 %v17
    %128 = vmatprep.subr.mxu0 0.0
    %129 = vmatpush1.msra.mxu0 %v18
    %130 = vmatprep.subr.mxu0 0.0
    %131 = vmatpush1.msra.mxu0 %v19
    %132 = vmatprep.subr.mxu0 0.0
    %133 = vmatpush1.msra.mxu0 %v20
    %134 = vmatprep.subr.mxu0 0.0
    %135 = vmatpush1.msra.mxu0 %v21
    %136 = vmatprep.subr.mxu0 0.0
    %137 = vmatpush1.msra.mxu0 %v22
    %138 = vmatprep.subr.mxu0 0.0
    %139 = vmatpush1.msra.mxu0 %v23
    %140 = vmatprep.subr.mxu0 0.0
    %141 = vmatpush1.msra.mxu0 %v24
    %142 = vmatprep.subr.mxu0 0.0
    %143 = vmatpush1.msra.mxu0 %v25
    %144 = vmatprep.subr.mxu0 0.0
    %145 = vmatpush1.msra.mxu0 %v26
    %146 = vmatprep.subr.mxu0 0.0
    %147 = vmatpush1.msra.mxu0 %v27
    %148 = vmatprep.subr.mxu0 0.0
    %149 = vmatpush1.msra.mxu0 %v28
    %150 = vmatprep.subr.mxu0 0.0
    %151 = vmatpush1.msra.mxu0 %v29
    %152 = vmatprep.subr.mxu0 0.0
    %153 = vmatpush1.msra.mxu0 0.0
    %154 = vmatprep.subr.mxu0 0.0
    %155 = vmatpush1.msra.mxu0 0.0
    %156 = vmatprep.subr.mxu0 0.0
    %157 = vmatpush1.msra.mxu0 0.0
    %158 = vmatprep.subr.mxu0 0.0
    %159 = vmatpush1.msra.mxu0 0.0
    %160 = vmatprep.subr.mxu0 0.0
    %161 = vmatpush1.msra.mxu0 0.0
    %162 = vmatprep.subr.mxu0 0.0
    %163 = vmatpush1.msra.mxu0 0.0
    %164 = vmatprep.subr.mxu0 0.0
    %165 = vmatpush1.msra.mxu0 0.0
    %166 = vmatprep.subr.mxu0 0.0
    %167 = vmatpush1.msra.mxu0 0.0
    %168 = vmatprep.subr.mxu0 0.0
    %169 = vmatpush1.msra.mxu0 0.0
    %170 = vmatprep.subr.mxu0 0.0
    %171 = vmatpush1.msra.mxu0 0.0
    %172 = vmatprep.subr.mxu0 0.0
    %173 = vmatpush1.msra.mxu0 0.0
    %174 = vmatprep.subr.mxu0 0.0
    %175 = vmatpush1.msra.mxu0 0.0
    %176 = vmatprep.subr.mxu0 0.0
    %177 = vmatpush1.msra.mxu0 0.0
    %178 = vmatprep.subr.mxu0 0.0
    %179 = vmatpush1.msra.mxu0 0.0
    %180 = vmatprep.subr.mxu0 0.0
    %181 = vmatpush1.msra.mxu0 0.0
    %182 = vmatprep.subr.mxu0 0.0
    %183 = vmatpush1.msra.mxu0 0.0
    %184 = vmatprep.subr.mxu0 0.0
    %185 = vmatpush1.msra.mxu0 0.0
    %186 = vmatprep.subr.mxu0 0.0
    %187 = vmatpush1.msra.mxu0 0.0
    %188 = vmatprep.mubr.f32.mxu0 0.0
    %189 = vmatmul.mubr.f32.gmra.mrb[0].mxu0 %v122
    %v190 = vpop.f32.mrb[0].mxu0
    %v191 = vadd.f32 %v118, %v190
    %v192 = vpop.f32.mrb[0].mxu0
    %193 = vdwg.mxu0
    %v194 = vld [vmem:[%s2] sm:$0x1]
    %v196 = vlaneseq
    %v197 = vshrl.u32 %v196, 7
    %v198 = vsub.s32 0, %v197
    %v199 = vrot.slane %v194, %v198
    %v201 = vadd.f32 %v191, %v199
    %vm202 = vcmask 35840
    %203 = vst.msk [vmem:[#allocation2] sm:$0xf] %vm202, %v201
    // Predicated region
    $region14: #{tpu_custom_call.1} parent=1 // pred_check
      _
    $region15: #{tpu_custom_call.1} parent=1 // pred_check_branch
      %205 = sbr.rel (0) target = $region17
    $region16: #{tpu_custom_call.1} parent=1 // pred_region
      %s207 = ssub.s32 64, 64
      %208 = vsyncadd [#allocation3], %s207
      %s210 = sshll.u32 [#allocation2], 4
      %s211 = int_to_ptr.vmem [resolvable:$true] %s210
      %213 = dma.vmem_to_hbm [thread:$0]  %s211, 64, %s3, [#allocation3]
    $region17: #{tpu_custom_call.1} parent=1 // pred_fallthru
      _
    // Predicated region
    $region18: #{tpu_custom_call.1} parent=1 // pred_check
      _
    $region19: #{tpu_custom_call.1} parent=1 // pred_check_branch
      %215 = sbr.rel (0) target = $region21
    $region20: #{tpu_custom_call.1} parent=1 // pred_region
      %216 = dma.done [#allocation3], 64
    $region21: #{tpu_custom_call.1} parent=1 // pred_fallthru
      _
    %217 = vsyncpa [#allocation3], 1

</llo_original>
